<compile_context>
chip_gen: v7x
topology: tpu7x:2x2x1
jax: 0.10.0
libtpu: 0.0.40
codegen_flags: <defaults>
</compile_context>

<pallas_src>
import math
import functools

import numpy as np
import jax
import jax.numpy as jnp
from jax.experimental import pallas as pl
from jax.experimental.pallas import tpu as pltpu


def _sinusoidal_kernel(freq_ref, phase_ref, off_ref, out_ref, *,
                       tile_rows: int, fold_k: int, padding_idx):
    """Write one (tile_rows, W) tile, W = fold_k * embedding_dim."""
    TS, W = out_ref.shape
    tile_start = pl.program_id(0) * tile_rows            # first folded row of this tile

    # Single int32 row iota per tile (folded-row index).
    row_i = jax.lax.broadcasted_iota(jnp.int32, (TS, 1), 0) + tile_start
    if fold_k == 1:
        pos = row_i.astype(jnp.float32)                                  # (TS, 1)
    else:
        pos = row_i.astype(jnp.float32) * float(fold_k) + off_ref[...]   # (TS, W)

    # Fused sin/cos: cos(x) = sin(x + pi/2); odd-D trailing column is sin(0)=0.
    emb = jnp.sin(pos * freq_ref[...] + phase_ref[...])                  # (TS, W)
    out_ref[...] = emb                   # single unmasked, lane-dense full-width store

    if padding_idx is not None:
        pad_row = padding_idx // fold_k  # folded row holding the padding position
        # Only the one tile containing padding_idx pays for the masking pass.
        @pl.when(jnp.logical_and(pad_row >= tile_start, pad_row < tile_start + TS))
        def _():
            out_ref[...] = jnp.where(pos == float(padding_idx), 0.0, emb)


@functools.lru_cache(maxsize=32)
def _build_table(seq_len: int, embedding_dim: int, padding_idx) -> jax.Array:
    """Builds the (1, seq_len, embedding_dim) table once per distinct config."""
    half_dim = embedding_dim // 2
    if half_dim < 2:
        # Reference divides by zero for embedding_dim in {2, 3}; fail loudly instead.
        raise ValueError("embedding_dim must be >= 4 for sinusoidal embeddings")
    log_scale = math.log(10000.0) / (half_dim - 1)
    inv_freq = np.exp(np.arange(half_dim, dtype=np.float32) * np.float32(-log_scale))

    # Per-embedding-dim frequency / phase rows (cos expressed as sin(x + pi/2)).
    freq_d = np.zeros((embedding_dim,), np.float32)
    freq_d[:half_dim] = inv_freq
    freq_d[half_dim:2 * half_dim] = inv_freq
    phase_d = np.zeros((embedding_dim,), np.float32)
    phase_d[half_dim:2 * half_dim] = np.float32(math.pi / 2)

    # Lane folding for narrow embeddings: pack fold_k consecutive positions per
    # lane row so W = lcm(D, 128) is a multiple of 128 (lane-dense vregs/stores).
    fold_k = (128 // math.gcd(embedding_dim, 128)) if embedding_dim < 128 else 1
    W = fold_k * embedding_dim
    folded_rows = -(-seq_len // fold_k)

    freq_w = np.tile(freq_d, fold_k)[None, :]                                    # (1, W)
    phase_w = np.tile(phase_d, fold_k)[None, :]                                  # (1, W)
    off_w = np.repeat(np.arange(fold_k, dtype=np.float32), embedding_dim)[None]  # (1, W)

    # Byte-budgeted row tile (~2 MiB of output per tile).  Kernel is VALU-bound
    # (polynomial sin on the VPU), not HBM-bound; the budget bounds VMEM and
    # amortizes per-grid-step overhead on all generations.
    TARGET_BYTES = 2 << 20
    rows_budget = max(8, (TARGET_BYTES // (4 * W)) // 8 * 8)
    tile_rows = min(rows_budget, folded_rows)
    # v7x megacore: ensure >= 2 grid steps when there is enough work so both
    # TensorCores get a share of the "parallel" axis (no-op on v5e/v6e).
    if tile_rows == folded_rows and folded_rows > 8:
        half = -(-folded_rows // 2)
        tile_rows = min(folded_rows, ((half + 7) // 8) * 8)
    grid = (pl.cdiv(folded_rows, tile_rows),)

    tile_bytes = tile_rows * W * 4
    # Double-buffered output + compiler-materialized intermediates + headroom,
    # kept within v5e's 16 MiB default scoped VMEM and v7x's 64 MiB physical.
    vmem_limit = int(min(max(6 * tile_bytes + (1 << 20), 16 << 20), 48 << 20))

    kernel = functools.partial(_sinusoidal_kernel, tile_rows=tile_rows,
                               fold_k=fold_k, padding_idx=padding_idx)

    emb = pl.pallas_call(
        kernel,
        out_shape=jax.ShapeDtypeStruct((folded_rows, W), jnp.float32),
        grid=grid,
        in_specs=[pl.BlockSpec((1, W), lambda i: (0, 0)),
                  pl.BlockSpec((1, W), lambda i: (0, 0)),
                  pl.BlockSpec((1, W), lambda i: (0, 0))],
        out_specs=pl.BlockSpec((tile_rows, W), lambda i: (i, 0)),
        compiler_params=pltpu.CompilerParams(
            dimension_semantics=("parallel",),
            vmem_limit_bytes=vmem_limit),
    )(jnp.asarray(freq_w), jnp.asarray(phase_w), jnp.asarray(off_w))

    # Unfold lane-packed positions back to (seq_len, embedding_dim).
    table = emb.reshape(folded_rows * fold_k, embedding_dim)[:seq_len]
    return table[None, :, :]


def sinusoidal_positional_embedding(x: jax.Array,
                                    embedding_dim: int,
                                    padding_idx) -> jax.Array:
    """JAX/Pallas equivalent of SinusoidalPositionalEmbedding.forward.

    x: (bsz, seq_len, _) -- only the shape is used.
    returns: (1, seq_len, embedding_dim) float32
    """
    _, seq_len, _ = x.shape
    pad = None if padding_idx is None else int(padding_idx)
    return _build_table(int(seq_len), int(embedding_dim), pad)


def _reference_numpy(seq_len, embedding_dim, padding_idx):
    half_dim = embedding_dim // 2
    emb = math.log(10000) / (half_dim - 1)
    emb = np.exp(np.arange(half_dim, dtype=np.float32) * -emb)
    emb = np.arange(seq_len, dtype=np.float32)[:, None] * emb[None, :]
    emb = np.concatenate([np.sin(emb), np.cos(emb)], axis=1).reshape(seq_len, -1)
    if embedding_dim % 2 == 1:
        emb = np.concatenate([emb, np.zeros((seq_len, 1), np.float32)], axis=1)
    if padding_idx is not None:
        emb[padding_idx, :] = 0
    return emb[None]


if __name__ == "__main__":
    key = jax.random.PRNGKey(0)
    bsz = 2

    # Case 1: narrow embedding (D=32 -> lane-folded, fold_k=4, W=128)
    seq_len, embedding_dim, padding_idx = 8, 32, 0
    x = jax.random.normal(key, (bsz, seq_len, embedding_dim), dtype=jnp.float32)
    out = jax.block_until_ready(
        sinusoidal_positional_embedding(x, embedding_dim, padding_idx))
    assert out.shape == (1, seq_len, embedding_dim), out.shape
    np.testing.assert_allclose(
        np.asarray(out), _reference_numpy(seq_len, embedding_dim, padding_idx),
        rtol=1e-5, atol=1e-5)

    # Case 2: lane-aligned embedding (D=256, fold_k=1, grid split across 2 tiles)
    seq_len2, embedding_dim2, padding_idx2 = 16, 256, 1
    x2 = jax.random.normal(key, (bsz, seq_len2, embedding_dim2), dtype=jnp.float32)
    out2 = jax.block_until_ready(
        sinusoidal_positional_embedding(x2, embedding_dim2, padding_idx2))
    assert out2.shape == (1, seq_len2, embedding_dim2), out2.shape
    np.testing.assert_allclose(
        np.asarray(out2), _reference_numpy(seq_len2, embedding_dim2, padding_idx2),
        rtol=1e-5, atol=1e-5)

    # Case 3: odd embedding dim (D=33 -> zero last column, fold_k=128)
    seq_len3, embedding_dim3, padding_idx3 = 20, 33, 2
    x3 = jax.random.normal(key, (bsz, seq_len3, embedding_dim3), dtype=jnp.float32)
    out3 = jax.block_until_ready(
        sinusoidal_positional_embedding(x3, embedding_dim3, padding_idx3))
    assert out3.shape == (1, seq_len3, embedding_dim3), out3.shape
    np.testing.assert_allclose(
        np.asarray(out3), _reference_numpy(seq_len3, embedding_dim3, padding_idx3),
        rtol=1e-5, atol=1e-5)

    print("KERNEL_OK")
</pallas_src>

<mosaic_0001>
module attributes {stable_mosaic.version = 11 : i64} {
  func.func @_sinusoidal_kernel(%arg0: i32, %arg1: memref<1x128xf32, #tpu.memory_space<vmem>>, %arg2: memref<1x128xf32, #tpu.memory_space<vmem>>, %arg3: memref<1x128xf32, #tpu.memory_space<vmem>>, %arg4: memref<2x128xf32, #tpu.memory_space<vmem>>) attributes {dimension_semantics = [#tpu.dimension_semantics<parallel>], iteration_bounds = array<i64: 1>, scalar_prefetch = 0 : i64, scratch_operands = 0 : i64, tpu.core_type = #tpu.core_type<tc>, window_params = [{pipeline_mode = #tpu.pipeline_mode<synchronous>, transform_indices = @transform_0, window_bounds = array<i64: 1, 128>}, {pipeline_mode = #tpu.pipeline_mode<synchronous>, transform_indices = @transform_1, window_bounds = array<i64: 1, 128>}, {pipeline_mode = #tpu.pipeline_mode<synchronous>, transform_indices = @transform_2, window_bounds = array<i64: 1, 128>}, {transform_indices = @transform_3, window_bounds = array<i64: 2, 128>}]} {
    %c2_i32 = arith.constant 2 : i32
    %0 = arith.muli %arg0, %c2_i32 : i32
    %1 = tpu.iota {dimensions = array<i32: 0>} : vector<2x1xi32>
    %2 = vector.broadcast %0 : i32 to vector<2x1xi32>
    %3 = arith.addi %1, %2 : vector<2x1xi32>
    %4 = arith.sitofp %3 : vector<2x1xi32> to vector<2x1xf32>
    %cst = arith.constant 4.000000e+00 : f32
    %5 = vector.broadcast %cst : f32 to vector<2x1xf32>
    %6 = arith.mulf %4, %5 : vector<2x1xf32>
    %c0 = arith.constant 0 : index
    %c0_0 = arith.constant 0 : index
    %7 = vector.load %arg3[%c0, %c0_0] : memref<1x128xf32, #tpu.memory_space<vmem>>, vector<1x128xf32>
    %8 = vector.broadcast %6 : vector<2x1xf32> to vector<2x128xf32>
    %9 = vector.broadcast %7 : vector<1x128xf32> to vector<2x128xf32>
    %10 = arith.addf %8, %9 : vector<2x128xf32>
    %c0_1 = arith.constant 0 : index
    %c0_2 = arith.constant 0 : index
    %11 = vector.load %arg1[%c0_1, %c0_2] : memref<1x128xf32, #tpu.memory_space<vmem>>, vector<1x128xf32>
    %12 = vector.broadcast %11 : vector<1x128xf32> to vector<2x128xf32>
    %13 = arith.mulf %10, %12 : vector<2x128xf32>
    %c0_3 = arith.constant 0 : index
    %c0_4 = arith.constant 0 : index
    %14 = vector.load %arg2[%c0_3, %c0_4] : memref<1x128xf32, #tpu.memory_space<vmem>>, vector<1x128xf32>
    %15 = vector.broadcast %14 : vector<1x128xf32> to vector<2x128xf32>
    %16 = arith.addf %13, %15 : vector<2x128xf32>
    %17 = math.sin %16 : vector<2x128xf32>
    %c0_5 = arith.constant 0 : index
    %c0_6 = arith.constant 0 : index
    %18 = vector.load %arg4[%c0_5, %c0_6] : memref<2x128xf32, #tpu.memory_space<vmem>>, vector<2x128xf32>
    tpu.vector_store %arg4[%c0_5, %c0_6], %17 {strides = array<i32>} : memref<2x128xf32, #tpu.memory_space<vmem>>, vector<2x128xf32>,
    %c0_i32 = arith.constant 0 : i32
    %19 = arith.cmpi sle, %0, %c0_i32 : i32
    %c2_i32_7 = arith.constant 2 : i32
    %20 = arith.addi %0, %c2_i32_7 : i32
    %c0_i32_8 = arith.constant 0 : i32
    %21 = arith.cmpi sgt, %20, %c0_i32_8 : i32
    %22 = arith.andi %19, %21 : i1
    %23 = arith.extui %22 : i1 to i32
    %c0_i32_9 = arith.constant 0 : i32
    %24 = arith.cmpi ne, %23, %c0_i32_9 : i32
    scf.if %24 {
      %cst_10 = arith.constant 0.000000e+00 : f32
      %25 = vector.broadcast %cst_10 : f32 to vector<2x128xf32>
      %26 = arith.cmpf oeq, %10, %25 : vector<2x128xf32>
      %cst_11 = arith.constant 0.000000e+00 : f32
      %27 = vector.broadcast %cst_11 : f32 to vector<2x128xf32>
      %28 = arith.select %26, %27, %17 : vector<2x128xi1>, vector<2x128xf32>
      %c0_12 = arith.constant 0 : index
      %c0_13 = arith.constant 0 : index
      %29 = vector.load %arg4[%c0_12, %c0_13] : memref<2x128xf32, #tpu.memory_space<vmem>>, vector<2x128xf32>
      tpu.vector_store %arg4[%c0_12, %c0_13], %28 {strides = array<i32>} : memref<2x128xf32, #tpu.memory_space<vmem>>, vector<2x128xf32>,
    } else {
    }
    return
  }
  func.func @transform_0(%arg0: i32) -> (i32, i32) {
    %c0_i32 = arith.constant 0 : i32
    %c0_i32_0 = arith.constant 0 : i32
    %c0_i32_1 = arith.constant 0 : i32
    return %c0_i32, %c0_i32_0 : i32, i32
  }
  func.func @transform_1(%arg0: i32) -> (i32, i32) {
    %c0_i32 = arith.constant 0 : i32
    %c0_i32_0 = arith.constant 0 : i32
    %c0_i32_1 = arith.constant 0 : i32
    return %c0_i32, %c0_i32_0 : i32, i32
  }
  func.func @transform_2(%arg0: i32) -> (i32, i32) {
    %c0_i32 = arith.constant 0 : i32
    %c0_i32_0 = arith.constant 0 : i32
    %c0_i32_1 = arith.constant 0 : i32
    return %c0_i32, %c0_i32_0 : i32, i32
  }
  func.func @transform_3(%arg0: i32) -> (i32, i32) {
    %c0_i32 = arith.constant 0 : i32
    %c0_i32_0 = arith.constant 0 : i32
    return %arg0, %c0_i32 : i32, i32
  }
}

</mosaic_0001>

<llo_original>
// kernel: tpu_custom_call.1
$region0: #{tpu_custom_call.1}
  #allocation0 [shape = 'u32[]', space=smem, size = 0x4, offset = 0x4, fixed_abs, tag = 'smem constant byte address 0x4 - core index']
  #allocation1 [shape = 'u32[144,128]{1,0:T(1,128)}', space=vmem, size = 0x12000, scoped, tag = 'internal scratch']
  %s0 = inlined_call_operand.hbm [shape: f32[1,128], index: 0, kind: input, shape index: {}]
  %s1 = inlined_call_operand.vmem [shape: f32[1,128], index: 1, kind: input, shape index: {}]
  %s2 = inlined_call_operand.vmem [shape: f32[1,128], index: 2, kind: input, shape index: {}]
  %s3 = inlined_call_operand.hbm [shape: f32[2,128], index: 3, kind: output, shape index: {}]
  %s4 = sld [smem:[#allocation0]]
  $region30: #{tpu_custom_call.1} parent=0
    _
  %s6 = ssub.s32 1, %s4
  %s7 = scalar_select 0, %s6, %s4
  $region1: #{tpu_custom_call.1} parent=0
    #allocation2 [shape = 'u8[512]{0}', space=vmem, size = 0x400, scoped, tag = 'input window, operand 0, single buffered']
    #allocation3 [shape = 's32[1]{0}', space=sflag, size = 0x4, scoped, tag = 'scoped memory for tpu_custom_call.1']
    #allocation4 [shape = 's32[1]{0}', space=sflag, size = 0x4, scoped, tag = 'scoped memory for tpu_custom_call.1']
    #allocation5 [shape = 'u8[1024]{0}', space=vmem, size = 0x400, scoped, tag = 'output window, operand 0, single buffered']
    %8 = vsyncpa [#allocation3], 0
    %9 = vsyncpa [#allocation4], 0
    // Predicated region
    $region2: #{tpu_custom_call.1} parent=1 // pred_check
      _
    $region3: #{tpu_custom_call.1} parent=1 // pred_check_branch
      %11 = sbr.rel (0) target = $region5
    $region4: #{tpu_custom_call.1} parent=1 // pred_region
      %s13 = ssub.s32 16, 16
      %14 = vsyncadd [#allocation3], %s13
      %s16 = sshll.u32 [#allocation2], 4
      %s17 = int_to_ptr.vmem [resolvable:$true] %s16
      %19 = dma.hbm_to_vmem [thread:$0]  %s0, 16, %s17, [#allocation3]
    $region5: #{tpu_custom_call.1} parent=1 // pred_fallthru
      _
    // Predicated region
    $region6: #{tpu_custom_call.1} parent=1 // pred_check
      _
    $region7: #{tpu_custom_call.1} parent=1 // pred_check_branch
      %21 = sbr.rel (0) target = $region9
    $region8: #{tpu_custom_call.1} parent=1 // pred_region
      _
    $region9: #{tpu_custom_call.1} parent=1 // pred_fallthru
      _
    // Predicated region
    $region10: #{tpu_custom_call.1} parent=1 // pred_check
      _
    $region11: #{tpu_custom_call.1} parent=1 // pred_check_branch
      %23 = sbr.rel (0) target = $region13
    $region12: #{tpu_custom_call.1} parent=1 // pred_region
      _
    $region13: #{tpu_custom_call.1} parent=1 // pred_fallthru
      _
    // Predicated region
    $region14: #{tpu_custom_call.1} parent=1 // pred_check
      _
    $region15: #{tpu_custom_call.1} parent=1 // pred_check_branch
      %25 = sbr.rel (0) target = $region17
    $region16: #{tpu_custom_call.1} parent=1 // pred_region
      %26 = dma.done [#allocation3], 16
    $region17: #{tpu_custom_call.1} parent=1 // pred_fallthru
      _
    %s27 = smul.u32 0, 2
    %v28 = vlaneseq
    %v29 = vshrl.u32 %v28, 7
    %v30 = vstv %s27
    %v31 = vadd.s32 %v29, %v30
    %v32 = vcvt.s32.f32 %v31
    %v33 = vmul.f32 %v32, 4.0
    %v34 = vld [vmem:[%s2] sm:$0x1]
    %v36 = vlaneseq
    %v37 = vshrl.u32 %v36, 7
    %v38 = vsub.s32 0, %v37
    %v39 = vrot.slane %v34, %v38
    %v41 = vadd.f32 %v33, %v39
    %v42 = vld [vmem:[#allocation2] sm:$0x1]
    %v44 = vlaneseq
    %v45 = vshrl.u32 %v44, 7
    %v46 = vsub.s32 0, %v45
    %v47 = vrot.slane %v42, %v46
    %v49 = vmul.f32 %v41, %v47
    %v50 = vld [vmem:[%s1] sm:$0x1]
    %v52 = vlaneseq
    %v53 = vshrl.u32 %v52, 7
    %v54 = vsub.s32 0, %v53
    %v55 = vrot.slane %v50, %v54
    %v57 = vadd.f32 %v49, %v55
    %v58 = vand.u32 2147483647, %v57
    %vm59 = vcmp.le.f32.partialorder %v58, 0.7853982
    %vm60 = vcmp.lt.s32.totalorder %v57, 0
    %v61 = vand.u32 %v57, 2139095040
    %v62 = vshrl.u32 %v61, 23
    %v63 = vsub.s32 %v62, 127
    %v64 = vand.u32 2147483647, %v57
    %v65 = vand.u32 %v64, 8388607
    %v66 = vor.u32 %v65, 8388608
    %v67 = vsub.s32 0, %v66
    %v68 = vadd.s32 %v63, 1
    %vm69 = vcmp.gt.s32.totalorder %v68, 0
    %v70 = vsel %vm69, %v68, 0
    %v71 = vshrl.u32 %v70, 5
    %v72 = vand.u32 %v70, 31
    %v73 = vsub.s32 32, %v72
    %v74 = vshrl.u32 683565275, %v73
    %v75 = vshll.u32 683565275, %v72
    %v76 = vshrl.u32 2475754826, %v73
    %v77 = vor.u32 %v75, %v76
    %v78 = vshll.u32 2475754826, %v72
    %v79 = vshrl.u32 2131351028, %v73
    %v80 = vor.u32 %v78, %v79
    %v81 = vshll.u32 2131351028, %v72
    %v82 = vshrl.u32 2102212464, %v73
    %v83 = vor.u32 %v81, %v82
    %v84 = vshll.u32 2102212464, %v72
    %v85 = vshrl.u32 920167782, %v73
    %v86 = vor.u32 %v84, %v85
    %v87 = vshll.u32 920167782, %v72
    %v88 = vshrl.u32 1326507024, %v73
    %v89 = vor.u32 %v87, %v88
    %vm90 = vcmp.lt.s32.totalorder %v71, 1
    %vm91 = vcmp.lt.s32.totalorder %v71, 2
    %vm92 = vcmp.lt.s32.totalorder %v71, 3
    %vm93 = vcmp.lt.s32.totalorder %v71, 4
    %v94 = vsel %vm90, %v74, %v77
    %v95 = vsel %vm93, %v83, 2102212464
    %v96 = vsel %vm92, %v80, %v95
    %v97 = vsel %vm91, %v94, %v96
    %v98 = vsel %vm90, %v77, %v80
    %v99 = vsel %vm93, %v86, 920167782
    %v100 = vsel %vm92, %v83, %v99
    %v101 = vsel %vm91, %v98, %v100
    %v102 = vsel %vm90, %v80, %v83
    %v103 = vsel %vm93, %v89, 1326507024
    %v104 = vsel %vm92, %v86, %v103
    %v105 = vsel %vm91, %v102, %v104
    %v106 = vshll.u32 %v66, 8
    %v107 = vmul.u32.u64.compose %v106, %v105
    %v108 = vextract.low.u32 %v107
    %v109 = vextract.high.u32 %v107
    %v110 = vmul.u32.u64.compose %v106, %v101
    %v111 = vextract.low.u32 %v110
    %v112 = vextract.high.u32 %v110
    %v113 = vmul.u32 %v106, %v97
    %v114 = vadd.s32 %v109, %v111
    %vm115 = vc.u32 %v109, %v111
    %v116 = vadd.s32 %v112, 1
    %v117 = vsel %vm115, %v116, %v112
    %v118 = vadd.s32 %v113, %v117
    %v119 = vadd.s32 %v118, 536870912
    %v120 = vshrl.u32 %v119, 30
    %v121 = vshll.u32 %v120, 30
    %v122 = vsub.s32 %v118, %v121
    %vm123 = vcmp.lt.s32.totalorder %v122, 0
    %v124 = vsub.s32 0, %v122
    %v125 = vsel %vm123, %v124, %v122
    %v126 = vclz %v125
    %v127 = vsub.s32 %v126, 2
    %vm128 = vcmp.gt.s32.totalorder 0, %v127
    %v129 = vsel %vm128, 0, %v127
    %v130 = vsub.s32 32, %v129
    %v131 = vshll.u32 %v122, %v129
    %v132 = vshrl.u32 %v114, %v130
    %v133 = vor.u32 %v131, %v132
    %v134 = vsub.s32 4294967266, %v129
    %v135 = vadd.s32 %v134, 127
    %v136 = vshll.u32 %v135, 23
    %v137 = vor.u32 4788187, %v136
    %v138 = vand.u32 2147483647, %v137
    %v140 = vcvt.s32.f32 %v133
    %v141 = vmul.f32 %v140, %v138
    %v142 = vxor.u32 %v141, 2147483648
    %v143 = vsel %vm60, %v142, %v141
    %v144 = vsub.s32 4, %v120
    %v145 = vsel %vm60, %v144, %v120
    %v146 = vsel %vm59, %v57, %v143
    %v147 = vsel %vm59, 0, %v145
    %v148 = vcosq.f32.pop %v146
    %v149 = vsinq.f32.pop %v146
    %vm150 = vweird.f32 %v57
    %v151 = vadd.s32 %v147, 3
    %v152 = vand.u32 %v151, 3
    %vm153 = vcmp.lt.s32.totalorder %v152, 2
    %vm154 = vcmp.eq.s32.totalorder %v152, 0
    %v155 = vxor.u32 %v149, 2147483648
    %v156 = vsel %vm154, %v148, %v155
    %vm157 = vcmp.eq.s32.totalorder %v152, 2
    %v158 = vxor.u32 %v148, 2147483648
    %v159 = vsel %vm157, %v158, %v149
    %v160 = vsel %vm153, %v156, %v159
    %v161 = vsel %vm150, nan, %v160
    %162 = vst [vmem:[#allocation5] sm:$0x3] %v161
    %p163 = scmp.le.s32.totalorder %s27, 0
    %s164 = sadd.s32 %s27, 2
    %p165 = scmp.gt.s32.totalorder %s164, 0
    %p166 = pnand %p163, %p165
    %p167 = pneg %p166
    // Predicated region
    $region18: #{tpu_custom_call.1} parent=1 // pred_check
      _
    $region19: #{tpu_custom_call.1} parent=1 // pred_check_branch
      %169 = sbr.rel (%p166) target = $region21
    $region20: #{tpu_custom_call.1} parent=1 // pred_region
      %vm170 = vcmp.eq.f32.partialorder %v41, 0.0
      %v171 = vsel %vm170, 0.0, %v161
      %172 = vst [vmem:[#allocation5] sm:$0x3] %v171
    $region21: #{tpu_custom_call.1} parent=1 // pred_fallthru
      _
    // Predicated region
    $region22: #{tpu_custom_call.1} parent=1 // pred_check
      _
    $region23: #{tpu_custom_call.1} parent=1 // pred_check_branch
      %174 = sbr.rel (0) target = $region25
    $region24: #{tpu_custom_call.1} parent=1 // pred_region
      %s176 = ssub.s32 32, 32
      %177 = vsyncadd [#allocation4], %s176
      %s179 = sshll.u32 [#allocation5], 4
      %s180 = int_to_ptr.vmem [resolvable:$true] %s179
      %182 = dma.vmem_to_hbm [thread:$0]  %s180, 32, %s3, [#allocation4]
    $region25: #{tpu_custom_call.1} parent=1 // pred_fallthru
      _
    // Predicated region
    $region26: #{tpu_custom_call.1} parent=1 // pred_check
      _
    $region27: #{tpu_custom_call.1} parent=1 // pred_check_branch
      %184 = sbr.rel (0) target = $region29
    $region28: #{tpu_custom_call.1} parent=1 // pred_region
      %185 = dma.done [#allocation4], 32
    $region29: #{tpu_custom_call.1} parent=1 // pred_fallthru
      _
    %186 = vsyncpa [#allocation3], 1
    %187 = vsyncpa [#allocation4], 1

</llo_original>
